<compile_context>
chip_gen: v6e
topology: v6e:2x2x1
jax: 0.10.0
libtpu: 0.0.40
codegen_flags: <defaults>
</compile_context>

<pallas_src>
import jax
import jax.numpy as jnp
from jax import lax
from jax.experimental import pallas as pl
from jax.experimental.pallas import tpu as pltpu

_SUBLANES = 8  # ids per grid step are laid out as (C, 8): 8 lane-chunks of C tokens


def _embed_kernel(ids_ref, table_ref, out_ref):
    """One grid step: gather TN = 8*C embedding rows via one-hot MXU matmuls.

    ids_ref   : VMEM (1, C, 8) int32 -- ids_ref[0, l, s] = id of local token s*C + l
    table_ref : VMEM (V, D)          -- full embedding table (resident small-vocab path)
    out_ref   : VMEM (TN, D)         -- output tile, rows in local token order
    """
    ids = ids_ref[0]                       # (C, 8) int32, loaded once
    table = table_ref[...]                 # (V, D)
    c, n_sub = ids.shape
    v = table.shape[0]
    # Vocabulary index along lanes; compared against a (C, 1) id column it yields
    # a (C, V) one-hot whose single 1.0 per row selects the embedding row on the MXU.
    vocab_iota = lax.broadcasted_iota(jnp.int32, (c, v), 1)
    for s in range(n_sub):                 # static 8-way unroll; chunk s = rows [s*C, (s+1)*C)
        ids_col = ids[:, s:s + 1]          # (C, 1): static lane slice, no relayout needed
        onehot = (vocab_iota == ids_col).astype(table.dtype)      # (C, V), exactly 0/1
        chunk = jnp.dot(onehot, table, preferred_element_type=jnp.float32)  # (C, D)
        out_ref[s * c:(s + 1) * c, :] = chunk.astype(out_ref.dtype)


def _choose_tokens_per_step(n, target):
    """Pick a tile size (multiple of 8) near `target` that divides n if possible.

    A divisor of n means N_pad == N, so the post-call slice (an extra full HBM
    copy of this write-bound op's output) is skipped and the final reshape is free.
    """
    target = max(_SUBLANES, (min(target, n) // _SUBLANES) * _SUBLANES)
    if n % target == 0:
        return target
    lo = max(_SUBLANES, target // 4)   # don't shrink tiles below target/4 just to avoid padding
    for tn in range(target, lo - 1, -_SUBLANES):
        if n % tn == 0:
            return tn
    return target                      # padding path (out-of-range ids, sliced off after)


def learned_token_embedding(x, table, *, tokens_per_step=2048):
    """Pallas TPU forward of LearnedTokenEmbedding: out[b, s] = table[x[b, s]].

    x     : (B, S) integer token ids
    table : (V, D) embedding matrix (padding_idx row pre-zeroed, as in nn.Embedding)
    returns (B, S, D) in table.dtype
    """
    B, S = x.shape
    V, D = table.shape
    N = B * S

    tn = _choose_tokens_per_step(N, tokens_per_step)
    grid_len = pl.cdiv(N, tn)
    n_pad = grid_len * tn
    c = tn // _SUBLANES

    ids = x.reshape(N).astype(jnp.int32)
    if n_pad != N:
        # Out-of-range id (== V) matches no one-hot column -> padded rows are exactly 0.
        ids = jnp.pad(ids, (0, n_pad - N), constant_values=V)
    # Lane-dense id layout: ids3[i, l, s] = flat_id[i*tn + s*c + l].  Each grid step's
    # (1, c, 8) block is one dense contiguous 4*tn-byte DMA, and the kernel recovers the
    # per-chunk (c, 1) id column with a static lane slice.  (The old (N, 1) column layout
    # wasted ~128x VMEM and degenerated into 4-byte strided DMA writes.)
    ids3 = ids.reshape(grid_len, _SUBLANES, c).transpose(0, 2, 1)

    itemsize = jnp.dtype(table.dtype).itemsize
    # Explicit VMEM budget (v7x: 64 MiB physical / 32 MiB scoped default).
    vmem_needed = (
        2 * tn * D * itemsize        # output tile, double-buffered
        + 2 * c * 128 * 4            # ids tiles (8 data lanes padded to 128), double-buffered
        + 2 * V * D * itemsize       # table (constant index_map; still 2 buffers by default)
        + c * (V + D) * 4            # in-kernel one-hot + chunk intermediates
    )
    vmem_limit = int(min(64 * 1024 * 1024, max(16 * 1024 * 1024, 2 * vmem_needed)))

    cost = pl.CostEstimate(
        flops=2 * n_pad * V * D,                 # one-hot matmuls
        transcendentals=0,
        bytes_accessed=V * D * itemsize + n_pad * 4 + n_pad * D * itemsize,
    )

    out_flat = pl.pallas_call(
        _embed_kernel,
        out_shape=jax.ShapeDtypeStruct((n_pad, D), table.dtype),
        grid_spec=pltpu.PrefetchScalarGridSpec(
            num_scalar_prefetch=0,
            grid=(grid_len,),
            in_specs=[
                # Dense per-step token-id block (last two dims == full array dims).
                pl.BlockSpec((1, c, _SUBLANES), lambda i: (i, 0, 0)),
                # Full embedding table resident in VMEM (small/medium-vocab path).
                pl.BlockSpec((V, D), lambda i: (0, 0)),
            ],
            out_specs=pl.BlockSpec((tn, D), lambda i: (i, 0)),
        ),
        compiler_params=pltpu.CompilerParams(
            dimension_semantics=("parallel",),
            vmem_limit_bytes=vmem_limit,
        ),
        cost_estimate=cost,
    )(ids3, table)

    if n_pad != N:
        out_flat = out_flat[:N]   # one extra HBM copy; avoided whenever tn divides N
    return out_flat.reshape(B, S, D)


def init_embedding_params(key, num_words, embed_dim, padding_idx):
    """Deterministic init mimicking nn.Embedding: N(0,1) with padding row zeroed."""
    w = jax.random.normal(key, (num_words, embed_dim), dtype=jnp.float32)
    w = w.at[padding_idx].set(0.0)
    return w


def _reference(x, table):
    return jnp.take(table, x, axis=0)


if __name__ == "__main__":
    num_words = 64
    embed_dim = 128
    padding_idx = 0

    key = jax.random.PRNGKey(0)
    k_w, k_x1, k_x2, k_x3 = jax.random.split(key, 4)

    table = init_embedding_params(k_w, num_words, embed_dim, padding_idx)

    # Primary small test (B=2, S=8): single grid step, no padding.
    x = jax.random.randint(k_x1, (2, 8), 0, num_words, dtype=jnp.int32)
    x = x.at[0, 0].set(padding_idx)   # make sure the padding row shows up
    out = jax.block_until_ready(learned_token_embedding(x, table))
    assert out.shape == (2, 8, embed_dim)
    assert jnp.allclose(out, _reference(x, table), atol=1e-5, rtol=1e-5), (
        "Pallas embedding mismatch vs reference"
    )
    assert jnp.allclose(out[0, 0], 0.0), "padding_idx row must be zero"

    # Multi-step grid (grid_len=3), tile divides N exactly -> no padding copy.
    x2 = jax.random.randint(k_x2, (4, 96), 0, num_words, dtype=jnp.int32)
    out2 = jax.block_until_ready(
        learned_token_embedding(x2, table, tokens_per_step=128))
    assert jnp.allclose(out2, _reference(x2, table), atol=1e-5, rtol=1e-5)

    # Ragged N (= 38): exercises the out-of-range-id padding + post-call slice path.
    x3 = jax.random.randint(k_x3, (2, 19), 0, num_words, dtype=jnp.int32)
    out3 = jax.block_until_ready(
        learned_token_embedding(x3, table, tokens_per_step=32))
    assert jnp.allclose(out3, _reference(x3, table), atol=1e-5, rtol=1e-5)

    print("KERNEL_OK")
</pallas_src>

<mosaic_0001>
module attributes {stable_mosaic.version = 11 : i64} {
  func.func @_embed_kernel(%arg0: i32, %arg1: memref<1x2x8xi32, #tpu.memory_space<vmem>>, %arg2: memref<64x128xf32, #tpu.memory_space<vmem>>, %arg3: memref<16x128xf32, #tpu.memory_space<vmem>>) attributes {dimension_semantics = [#tpu.dimension_semantics<parallel>], iteration_bounds = array<i64: 1>, scalar_prefetch = 0 : i64, scratch_operands = 0 : i64, tpu.core_type = #tpu.core_type<tc>, window_params = [{transform_indices = @transform_0, window_bounds = array<i64: 1, 2, 8>}, {pipeline_mode = #tpu.pipeline_mode<synchronous>, transform_indices = @transform_1, window_bounds = array<i64: 64, 128>}, {transform_indices = @transform_2, window_bounds = array<i64: 16, 128>}]} {
    %c0 = arith.constant 0 : index
    %c0_0 = arith.constant 0 : index
    %c0_1 = arith.constant 0 : index
    %0 = vector.load %arg1[%c0, %c0_0, %c0_1] : memref<1x2x8xi32, #tpu.memory_space<vmem>>, vector<1x2x8xi32>
    %1 = vector.shape_cast %0 : vector<1x2x8xi32> to vector<2x8xi32>
    %c0_2 = arith.constant 0 : index
    %c0_3 = arith.constant 0 : index
    %2 = vector.load %arg2[%c0_2, %c0_3] : memref<64x128xf32, #tpu.memory_space<vmem>>, vector<64x128xf32>
    %3 = tpu.iota {dimensions = array<i32: 1>} : vector<2x64xi32>
    %4 = vector.extract_strided_slice %1 {offsets = [0, 0], sizes = [2, 1], strides = [1, 1]} : vector<2x8xi32> to vector<2x1xi32>
    %5 = vector.broadcast %4 : vector<2x1xi32> to vector<2x64xi32>
    %6 = arith.cmpi eq, %3, %5 : vector<2x64xi32>
    %7 = arith.extui %6 : vector<2x64xi1> to vector<2x64xi32>
    %8 = arith.sitofp %7 : vector<2x64xi32> to vector<2x64xf32>
    %cst = arith.constant dense<0.000000e+00> : vector<2x128xf32>
    %9 = tpu.matmul %8, %2, %cst {dimension_numbers = #tpu.dot_dimension_numbers<[1], [0], [0], [1], [0, 0, 1, 1], [], []>} : vector<2x64xf32>, vector<64x128xf32>, vector<2x128xf32> -> vector<2x128xf32>
    %c0_4 = arith.constant 0 : index
    %c0_5 = arith.constant 0 : index
    %10 = vector.load %arg3[%c0_4, %c0_5] : memref<16x128xf32, #tpu.memory_space<vmem>>, vector<2x128xf32>
    tpu.vector_store %arg3[%c0_4, %c0_5], %9 {strides = array<i32>} : memref<16x128xf32, #tpu.memory_space<vmem>>, vector<2x128xf32>,
    %11 = vector.extract_strided_slice %1 {offsets = [0, 1], sizes = [2, 1], strides = [1, 1]} : vector<2x8xi32> to vector<2x1xi32>
    %12 = vector.broadcast %11 : vector<2x1xi32> to vector<2x64xi32>
    %13 = arith.cmpi eq, %3, %12 : vector<2x64xi32>
    %14 = arith.extui %13 : vector<2x64xi1> to vector<2x64xi32>
    %15 = arith.sitofp %14 : vector<2x64xi32> to vector<2x64xf32>
    %cst_6 = arith.constant dense<0.000000e+00> : vector<2x128xf32>
    %16 = tpu.matmul %15, %2, %cst_6 {dimension_numbers = #tpu.dot_dimension_numbers<[1], [0], [0], [1], [0, 0, 1, 1], [], []>} : vector<2x64xf32>, vector<64x128xf32>, vector<2x128xf32> -> vector<2x128xf32>
    %c2 = arith.constant 2 : index
    %c0_7 = arith.constant 0 : index
    %17 = vector.load %arg3[%c2, %c0_7] : memref<16x128xf32, #tpu.memory_space<vmem>>, vector<2x128xf32>
    tpu.vector_store %arg3[%c2, %c0_7], %16 {strides = array<i32>} : memref<16x128xf32, #tpu.memory_space<vmem>>, vector<2x128xf32>,
    %18 = vector.extract_strided_slice %1 {offsets = [0, 2], sizes = [2, 1], strides = [1, 1]} : vector<2x8xi32> to vector<2x1xi32>
    %19 = vector.broadcast %18 : vector<2x1xi32> to vector<2x64xi32>
    %20 = arith.cmpi eq, %3, %19 : vector<2x64xi32>
    %21 = arith.extui %20 : vector<2x64xi1> to vector<2x64xi32>
    %22 = arith.sitofp %21 : vector<2x64xi32> to vector<2x64xf32>
    %cst_8 = arith.constant dense<0.000000e+00> : vector<2x128xf32>
    %23 = tpu.matmul %22, %2, %cst_8 {dimension_numbers = #tpu.dot_dimension_numbers<[1], [0], [0], [1], [0, 0, 1, 1], [], []>} : vector<2x64xf32>, vector<64x128xf32>, vector<2x128xf32> -> vector<2x128xf32>
    %c4 = arith.constant 4 : index
    %c0_9 = arith.constant 0 : index
    %24 = vector.load %arg3[%c4, %c0_9] : memref<16x128xf32, #tpu.memory_space<vmem>>, vector<2x128xf32>
    tpu.vector_store %arg3[%c4, %c0_9], %23 {strides = array<i32>} : memref<16x128xf32, #tpu.memory_space<vmem>>, vector<2x128xf32>,
    %25 = vector.extract_strided_slice %1 {offsets = [0, 3], sizes = [2, 1], strides = [1, 1]} : vector<2x8xi32> to vector<2x1xi32>
    %26 = vector.broadcast %25 : vector<2x1xi32> to vector<2x64xi32>
    %27 = arith.cmpi eq, %3, %26 : vector<2x64xi32>
    %28 = arith.extui %27 : vector<2x64xi1> to vector<2x64xi32>
    %29 = arith.sitofp %28 : vector<2x64xi32> to vector<2x64xf32>
    %cst_10 = arith.constant dense<0.000000e+00> : vector<2x128xf32>
    %30 = tpu.matmul %29, %2, %cst_10 {dimension_numbers = #tpu.dot_dimension_numbers<[1], [0], [0], [1], [0, 0, 1, 1], [], []>} : vector<2x64xf32>, vector<64x128xf32>, vector<2x128xf32> -> vector<2x128xf32>
    %c6 = arith.constant 6 : index
    %c0_11 = arith.constant 0 : index
    %31 = vector.load %arg3[%c6, %c0_11] : memref<16x128xf32, #tpu.memory_space<vmem>>, vector<2x128xf32>
    tpu.vector_store %arg3[%c6, %c0_11], %30 {strides = array<i32>} : memref<16x128xf32, #tpu.memory_space<vmem>>, vector<2x128xf32>,
    %32 = vector.extract_strided_slice %1 {offsets = [0, 4], sizes = [2, 1], strides = [1, 1]} : vector<2x8xi32> to vector<2x1xi32>
    %33 = vector.broadcast %32 : vector<2x1xi32> to vector<2x64xi32>
    %34 = arith.cmpi eq, %3, %33 : vector<2x64xi32>
    %35 = arith.extui %34 : vector<2x64xi1> to vector<2x64xi32>
    %36 = arith.sitofp %35 : vector<2x64xi32> to vector<2x64xf32>
    %cst_12 = arith.constant dense<0.000000e+00> : vector<2x128xf32>
    %37 = tpu.matmul %36, %2, %cst_12 {dimension_numbers = #tpu.dot_dimension_numbers<[1], [0], [0], [1], [0, 0, 1, 1], [], []>} : vector<2x64xf32>, vector<64x128xf32>, vector<2x128xf32> -> vector<2x128xf32>
    %c8 = arith.constant 8 : index
    %c0_13 = arith.constant 0 : index
    %38 = vector.load %arg3[%c8, %c0_13] : memref<16x128xf32, #tpu.memory_space<vmem>>, vector<2x128xf32>
    tpu.vector_store %arg3[%c8, %c0_13], %37 {strides = array<i32>} : memref<16x128xf32, #tpu.memory_space<vmem>>, vector<2x128xf32>,
    %39 = vector.extract_strided_slice %1 {offsets = [0, 5], sizes = [2, 1], strides = [1, 1]} : vector<2x8xi32> to vector<2x1xi32>
    %40 = vector.broadcast %39 : vector<2x1xi32> to vector<2x64xi32>
    %41 = arith.cmpi eq, %3, %40 : vector<2x64xi32>
    %42 = arith.extui %41 : vector<2x64xi1> to vector<2x64xi32>
    %43 = arith.sitofp %42 : vector<2x64xi32> to vector<2x64xf32>
    %cst_14 = arith.constant dense<0.000000e+00> : vector<2x128xf32>
    %44 = tpu.matmul %43, %2, %cst_14 {dimension_numbers = #tpu.dot_dimension_numbers<[1], [0], [0], [1], [0, 0, 1, 1], [], []>} : vector<2x64xf32>, vector<64x128xf32>, vector<2x128xf32> -> vector<2x128xf32>
    %c10 = arith.constant 10 : index
    %c0_15 = arith.constant 0 : index
    %45 = vector.load %arg3[%c10, %c0_15] : memref<16x128xf32, #tpu.memory_space<vmem>>, vector<2x128xf32>
    tpu.vector_store %arg3[%c10, %c0_15], %44 {strides = array<i32>} : memref<16x128xf32, #tpu.memory_space<vmem>>, vector<2x128xf32>,
    %46 = vector.extract_strided_slice %1 {offsets = [0, 6], sizes = [2, 1], strides = [1, 1]} : vector<2x8xi32> to vector<2x1xi32>
    %47 = vector.broadcast %46 : vector<2x1xi32> to vector<2x64xi32>
    %48 = arith.cmpi eq, %3, %47 : vector<2x64xi32>
    %49 = arith.extui %48 : vector<2x64xi1> to vector<2x64xi32>
    %50 = arith.sitofp %49 : vector<2x64xi32> to vector<2x64xf32>
    %cst_16 = arith.constant dense<0.000000e+00> : vector<2x128xf32>
    %51 = tpu.matmul %50, %2, %cst_16 {dimension_numbers = #tpu.dot_dimension_numbers<[1], [0], [0], [1], [0, 0, 1, 1], [], []>} : vector<2x64xf32>, vector<64x128xf32>, vector<2x128xf32> -> vector<2x128xf32>
    %c12 = arith.constant 12 : index
    %c0_17 = arith.constant 0 : index
    %52 = vector.load %arg3[%c12, %c0_17] : memref<16x128xf32, #tpu.memory_space<vmem>>, vector<2x128xf32>
    tpu.vector_store %arg3[%c12, %c0_17], %51 {strides = array<i32>} : memref<16x128xf32, #tpu.memory_space<vmem>>, vector<2x128xf32>,
    %53 = vector.extract_strided_slice %1 {offsets = [0, 7], sizes = [2, 1], strides = [1, 1]} : vector<2x8xi32> to vector<2x1xi32>
    %54 = vector.broadcast %53 : vector<2x1xi32> to vector<2x64xi32>
    %55 = arith.cmpi eq, %3, %54 : vector<2x64xi32>
    %56 = arith.extui %55 : vector<2x64xi1> to vector<2x64xi32>
    %57 = arith.sitofp %56 : vector<2x64xi32> to vector<2x64xf32>
    %cst_18 = arith.constant dense<0.000000e+00> : vector<2x128xf32>
    %58 = tpu.matmul %57, %2, %cst_18 {dimension_numbers = #tpu.dot_dimension_numbers<[1], [0], [0], [1], [0, 0, 1, 1], [], []>} : vector<2x64xf32>, vector<64x128xf32>, vector<2x128xf32> -> vector<2x128xf32>
    %c14 = arith.constant 14 : index
    %c0_19 = arith.constant 0 : index
    %59 = vector.load %arg3[%c14, %c0_19] : memref<16x128xf32, #tpu.memory_space<vmem>>, vector<2x128xf32>
    tpu.vector_store %arg3[%c14, %c0_19], %58 {strides = array<i32>} : memref<16x128xf32, #tpu.memory_space<vmem>>, vector<2x128xf32>,
    return
  }
  func.func @transform_0(%arg0: i32) -> (i32, i32, i32) {
    %c0_i32 = arith.constant 0 : i32
    %c0_i32_0 = arith.constant 0 : i32
    %c0_i32_1 = arith.constant 0 : i32
    return %arg0, %c0_i32, %c0_i32_0 : i32, i32, i32
  }
  func.func @transform_1(%arg0: i32) -> (i32, i32) {
    %c0_i32 = arith.constant 0 : i32
    %c0_i32_0 = arith.constant 0 : i32
    %c0_i32_1 = arith.constant 0 : i32
    return %c0_i32, %c0_i32_0 : i32, i32
  }
  func.func @transform_2(%arg0: i32) -> (i32, i32) {
    %c0_i32 = arith.constant 0 : i32
    %c0_i32_0 = arith.constant 0 : i32
    return %arg0, %c0_i32 : i32, i32
  }
}

</mosaic_0001>

<llo_original>
// kernel: tpu_custom_call.1
$region0: #{tpu_custom_call.1}
  #allocation0 [shape = 'u32[]', space=smem, size = 0x4, offset = 0x4, fixed_abs, tag = 'smem constant byte address 0x4 - core index']
  #allocation1 [shape = 'u32[144,128]{1,0:T(1,128)}', space=vmem, size = 0x12000, scoped, tag = 'internal scratch']
  %s0 = inlined_call_operand.hbm [shape: s32[1,2,8], index: 0, kind: input, shape index: {}]
  %s1 = inlined_call_operand.hbm [shape: f32[64,128], index: 1, kind: input, shape index: {}]
  %s2 = inlined_call_operand.hbm [shape: f32[16,128], index: 2, kind: output, shape index: {}]
  %s3 = sld [smem:[#allocation0]]
  $region26: #{tpu_custom_call.1} parent=0
    _
  %s5 = ssub.s32 1, %s3
  %s6 = scalar_select 0, %s5, %s3
  $region1: #{tpu_custom_call.1} parent=0
    #allocation2 [shape = 'u8[1024]{0}', space=vmem, size = 0x400, scoped, tag = 'input window, operand 0, single buffered']
    #allocation3 [shape = 's32[1]{0}', space=sflag, size = 0x4, scoped, tag = 'scoped memory for tpu_custom_call.1']
    #allocation4 [shape = 's32[1]{0}', space=sflag, size = 0x4, scoped, tag = 'scoped memory for tpu_custom_call.1']
    #allocation5 [shape = 'u8[32768]{0}', space=vmem, size = 0x8000, scoped, tag = 'input window, operand 1, single buffered']
    #allocation6 [shape = 's32[1]{0}', space=sflag, size = 0x4, scoped, tag = 'scoped memory for tpu_custom_call.1']
    #allocation7 [shape = 'u8[8192]{0}', space=vmem, size = 0x2000, scoped, tag = 'output window, operand 0, single buffered']
    %7 = vsyncpa [#allocation3], 0
    %8 = vsyncpa [#allocation6], 0
    %9 = vsyncpa [#allocation4], 0
    // Predicated region
    $region2: #{tpu_custom_call.1} parent=1 // pred_check
      _
    $region3: #{tpu_custom_call.1} parent=1 // pred_check_branch
      %11 = sbr.rel (0) target = $region5
    $region4: #{tpu_custom_call.1} parent=1 // pred_region
      %s13 = ssub.s32 32, 32
      %14 = vsyncadd [#allocation3], %s13
      %s16 = sshll.u32 [#allocation2], 4
      %s17 = int_to_ptr.vmem [resolvable:$true] %s16
      %19 = dma.hbm_to_vmem [thread:$0]  %s0, 32, %s17, [#allocation3]
    $region5: #{tpu_custom_call.1} parent=1 // pred_fallthru
      _
    // Predicated region
    $region6: #{tpu_custom_call.1} parent=1 // pred_check
      _
    $region7: #{tpu_custom_call.1} parent=1 // pred_check_branch
      %21 = sbr.rel (0) target = $region9
    $region8: #{tpu_custom_call.1} parent=1 // pred_region
      %s23 = ssub.s32 1024, 1024
      %24 = vsyncadd [#allocation6], %s23
      %s25 = sshll.u32 [#allocation5], 4
      %s26 = int_to_ptr.vmem [resolvable:$true] %s25
      %31 = dma.hbm_to_vmem [thread:$0]  %s1, 1024, %s26, [#allocation6], 128, 128, 8
    $region9: #{tpu_custom_call.1} parent=1 // pred_fallthru
      _
    // Predicated region
    $region10: #{tpu_custom_call.1} parent=1 // pred_check
      _
    $region11: #{tpu_custom_call.1} parent=1 // pred_check_branch
      %33 = sbr.rel (0) target = $region13
    $region12: #{tpu_custom_call.1} parent=1 // pred_region
      %34 = dma.done [#allocation3], 32
    $region13: #{tpu_custom_call.1} parent=1 // pred_fallthru
      _
    // Predicated region
    $region14: #{tpu_custom_call.1} parent=1 // pred_check
      _
    $region15: #{tpu_custom_call.1} parent=1 // pred_check_branch
      %36 = sbr.rel (0) target = $region17
    $region16: #{tpu_custom_call.1} parent=1 // pred_region
      %37 = dma.done [#allocation6], 1024
    $region17: #{tpu_custom_call.1} parent=1 // pred_fallthru
      _
    %v38 = vld [vmem:[#allocation2] sm:$0x3]
    %v39 = vld [vmem:[#allocation5] sm:$0xff]
    %v40 = vld [vmem:[#allocation5 + $0x8] sm:$0xff]
    %v41 = vld [vmem:[#allocation5 + $0x10] sm:$0xff]
    %v42 = vld [vmem:[#allocation5 + $0x18] sm:$0xff]
    %v43 = vld [vmem:[#allocation5 + $0x20] sm:$0xff]
    %v44 = vld [vmem:[#allocation5 + $0x28] sm:$0xff]
    %v45 = vld [vmem:[#allocation5 + $0x30] sm:$0xff]
    %v46 = vld [vmem:[#allocation5 + $0x38] sm:$0xff]
    %v47 = vlaneseq
    %v48 = vand.u32 %v47, 127
    %49 = vset.pattern.permute.xlu0 0
    %50 = vperm.xlu0 %49, %v38
    %v51 = vpop.permute.xlu0 %50
    %vm52 = vcmp.eq.s32.totalorder %v48, %v51
    %v53 = vsel %vm52, 1, 0
    %v54 = vcvt.s32.f32 %v53
    %vm55 = vcmask 523264
    %v57 = vsel %vm55, %v54, 0
    %59 = vmatprep.subr.mxu0 0.0
    %60 = vmatpush1.msra.mxu0 0.0
    %61 = vmatprep.subr.mxu0 0.0
    %62 = vmatpush1.msra.mxu0 0.0
    %63 = vmatprep.subr.mxu0 0.0
    %64 = vmatpush1.msra.mxu0 0.0
    %65 = vmatprep.subr.mxu0 0.0
    %66 = vmatpush1.msra.mxu0 0.0
    %67 = vmatprep.subr.mxu0 0.0
    %68 = vmatpush1.msra.mxu0 0.0
    %69 = vmatprep.subr.mxu0 0.0
    %70 = vmatpush1.msra.mxu0 0.0
    %71 = vmatprep.subr.mxu0 0.0
    %72 = vmatpush1.msra.mxu0 0.0
    %73 = vmatprep.subr.mxu0 0.0
    %74 = vmatpush1.msra.mxu0 0.0
    %75 = vmatprep.subr.mxu0 0.0
    %76 = vmatpush1.msra.mxu0 %v46
    %77 = vmatprep.subr.mxu0 0.0
    %78 = vmatpush1.msra.mxu0 %v45
    %79 = vmatprep.subr.mxu0 0.0
    %80 = vmatpush1.msra.mxu0 %v44
    %81 = vmatprep.subr.mxu0 0.0
    %82 = vmatpush1.msra.mxu0 %v43
    %83 = vmatprep.subr.mxu0 0.0
    %84 = vmatpush1.msra.mxu0 %v42
    %85 = vmatprep.subr.mxu0 0.0
    %86 = vmatpush1.msra.mxu0 %v41
    %87 = vmatprep.subr.mxu0 0.0
    %88 = vmatpush1.msra.mxu0 %v40
    %89 = vmatprep.subr.mxu0 0.0
    %90 = vmatpush1.msra.mxu0 %v39
    %91 = vmatprep.subr.mxu0 0.0
    %92 = vmatpush2.msra.mxu0 0.0
    %93 = vmatprep.subr.mxu0 0.0
    %94 = vmatpush2.msra.mxu0 0.0
    %95 = vmatprep.subr.mxu0 0.0
    %96 = vmatpush2.msra.mxu0 0.0
    %97 = vmatprep.subr.mxu0 0.0
    %98 = vmatpush2.msra.mxu0 0.0
    %99 = vmatprep.subr.mxu0 0.0
    %100 = vmatpush2.msra.mxu0 0.0
    %101 = vmatprep.subr.mxu0 0.0
    %102 = vmatpush2.msra.mxu0 0.0
    %103 = vmatprep.subr.mxu0 0.0
    %104 = vmatpush2.msra.mxu0 0.0
    %105 = vmatprep.subr.mxu0 0.0
    %106 = vmatpush2.msra.mxu0 0.0
    %107 = vmatprep.subr.mxu0 0.0
    %108 = vmatpush2.msra.mxu0 0.0
    %109 = vmatprep.subr.mxu0 0.0
    %110 = vmatpush2.msra.mxu0 0.0
    %111 = vmatprep.subr.mxu0 0.0
    %112 = vmatpush2.msra.mxu0 0.0
    %113 = vmatprep.subr.mxu0 0.0
    %114 = vmatpush2.msra.mxu0 0.0
    %115 = vmatprep.subr.mxu0 0.0
    %116 = vmatpush2.msra.mxu0 0.0
    %117 = vmatprep.subr.mxu0 0.0
    %118 = vmatpush2.msra.mxu0 0.0
    %119 = vmatprep.subr.mxu0 0.0
    %120 = vmatpush2.msra.mxu0 0.0
    %121 = vmatprep.subr.mxu0 0.0
    %122 = vmatpush2.msra.mxu0 0.0
    %123 = vmatprep.mubr.f32.mxu0 0.0
    %124 = vmatmul.mubr.f32.gmra.mxu0 %v57
    %v125 = vpop.f32.mrf.mxu0
    %v126 = vadd.f32 0.0, %v125
    %v127 = vpop.f32.mrf.mxu0
    %128 = vdwg.mxu0
    %129 = vst [vmem:[#allocation7] sm:$0x3] %v126
    %130 = vset.pattern.permute.xlu0 1
    %131 = vperm.xlu0 %130, %v38
    %v132 = vpop.permute.xlu0 %131
    %vm133 = vcmp.eq.s32.totalorder %v48, %v132
    %v134 = vsel %vm133, 1, 0
    %v135 = vcvt.s32.f32 %v134
    %v137 = vsel %vm55, %v135, 0
    %139 = vmatprep.subr.mxu0 0.0
    %140 = vmatpush1.msra.mxu0 0.0
    %141 = vmatprep.subr.mxu0 0.0
    %142 = vmatpush1.msra.mxu0 0.0
    %143 = vmatprep.subr.mxu0 0.0
    %144 = vmatpush1.msra.mxu0 0.0
    %145 = vmatprep.subr.mxu0 0.0
    %146 = vmatpush1.msra.mxu0 0.0
    %147 = vmatprep.subr.mxu0 0.0
    %148 = vmatpush1.msra.mxu0 0.0
    %149 = vmatprep.subr.mxu0 0.0
    %150 = vmatpush1.msra.mxu0 0.0
    %151 = vmatprep.subr.mxu0 0.0
    %152 = vmatpush1.msra.mxu0 0.0
    %153 = vmatprep.subr.mxu0 0.0
    %154 = vmatpush1.msra.mxu0 0.0
    %155 = vmatprep.subr.mxu0 0.0
    %156 = vmatpush1.msra.mxu0 %v46
    %157 = vmatprep.subr.mxu0 0.0
    %158 = vmatpush1.msra.mxu0 %v45
    %159 = vmatprep.subr.mxu0 0.0
    %160 = vmatpush1.msra.mxu0 %v44
    %161 = vmatprep.subr.mxu0 0.0
    %162 = vmatpush1.msra.mxu0 %v43
    %163 = vmatprep.subr.mxu0 0.0
    %164 = vmatpush1.msra.mxu0 %v42
    %165 = vmatprep.subr.mxu0 0.0
    %166 = vmatpush1.msra.mxu0 %v41
    %167 = vmatprep.subr.mxu0 0.0
    %168 = vmatpush1.msra.mxu0 %v40
    %169 = vmatprep.subr.mxu0 0.0
    %170 = vmatpush1.msra.mxu0 %v39
    %171 = vmatprep.subr.mxu0 0.0
    %172 = vmatpush2.msra.mxu0 0.0
    %173 = vmatprep.subr.mxu0 0.0
    %174 = vmatpush2.msra.mxu0 0.0
    %175 = vmatprep.subr.mxu0 0.0
    %176 = vmatpush2.msra.mxu0 0.0
    %177 = vmatprep.subr.mxu0 0.0
    %178 = vmatpush2.msra.mxu0 0.0
    %179 = vmatprep.subr.mxu0 0.0
    %180 = vmatpush2.msra.mxu0 0.0
    %181 = vmatprep.subr.mxu0 0.0
    %182 = vmatpush2.msra.mxu0 0.0
    %183 = vmatprep.subr.mxu0 0.0
    %184 = vmatpush2.msra.mxu0 0.0
    %185 = vmatprep.subr.mxu0 0.0
    %186 = vmatpush2.msra.mxu0 0.0
    %187 = vmatprep.subr.mxu0 0.0
    %188 = vmatpush2.msra.mxu0 0.0
    %189 = vmatprep.subr.mxu0 0.0
    %190 = vmatpush2.msra.mxu0 0.0
    %191 = vmatprep.subr.mxu0 0.0
    %192 = vmatpush2.msra.mxu0 0.0
    %193 = vmatprep.subr.mxu0 0.0
    %194 = vmatpush2.msra.mxu0 0.0
    %195 = vmatprep.subr.mxu0 0.0
    %196 = vmatpush2.msra.mxu0 0.0
    %197 = vmatprep.subr.mxu0 0.0
    %198 = vmatpush2.msra.mxu0 0.0
    %199 = vmatprep.subr.mxu0 0.0
    %200 = vmatpush2.msra.mxu0 0.0
    %201 = vmatprep.subr.mxu0 0.0
    %202 = vmatpush2.msra.mxu0 0.0
    %203 = vmatprep.mubr.f32.mxu0 0.0
    %204 = vmatmul.mubr.f32.gmra.mxu0 %v137
    %v205 = vpop.f32.mrf.mxu0
    %v206 = vadd.f32 0.0, %v205
    %v207 = vpop.f32.mrf.mxu0
    %208 = vdwg.mxu0
    %209 = vst [vmem:[#allocation7 + $0x2] sm:$0x3] %v206
    %210 = vset.pattern.permute.xlu0 2
    %211 = vperm.xlu0 %210, %v38
    %v212 = vpop.permute.xlu0 %211
    %vm213 = vcmp.eq.s32.totalorder %v48, %v212
    %v214 = vsel %vm213, 1, 0
    %v215 = vcvt.s32.f32 %v214
    %v217 = vsel %vm55, %v215, 0
    %219 = vmatprep.subr.mxu0 0.0
    %220 = vmatpush1.msra.mxu0 0.0
    %221 = vmatprep.subr.mxu0 0.0
    %222 = vmatpush1.msra.mxu0 0.0
    %223 = vmatprep.subr.mxu0 0.0
    %224 = vmatpush1.msra.mxu0 0.0
    %225 = vmatprep.subr.mxu0 0.0
    %226 = vmatpush1.msra.mxu0 0.0
    %227 = vmatprep.subr.mxu0 0.0
    %228 = vmatpush1.msra.mxu0 0.0
    %229 = vmatprep.subr.mxu0 0.0
    %230 = vmatpush1.msra.mxu0 0.0
    %231 = vmatprep.subr.mxu0 0.0
    %232 = vmatpush1.msra.mxu0 0.0
    %233 = vmatprep.subr.mxu0 0.0
    %234 = vmatpush1.msra.mxu0 0.0
    %235 = vmatprep.subr.mxu0 0.0
    %236 = vmatpush1.msra.mxu0 %v46
    %237 = vmatprep.subr.mxu0 0.0
    %238 = vmatpush1.msra.mxu0 %v45
    %239 = vmatprep.subr.mxu0 0.0
    %240 = vmatpush1.msra.mxu0 %v44
    %241 = vmatprep.subr.mxu0 0.0
    %242 = vmatpush1.msra.mxu0 %v43
    %243 = vmatprep.subr.mxu0 0.0
    %244 = vmatpush1.msra.mxu0 %v42
    %245 = vmatprep.subr.mxu0 0.0
    %246 = vmatpush1.msra.mxu0 %v41
    %247 = vmatprep.subr.mxu0 0.0
    %248 = vmatpush1.msra.mxu0 %v40
    %249 = vmatprep.subr.mxu0 0.0
    %250 = vmatpush1.msra.mxu0 %v39
    %251 = vmatprep.subr.mxu0 0.0
    %252 = vmatpush2.msra.mxu0 0.0
    %253 = vmatprep.subr.mxu0 0.0
    %254 = vmatpush2.msra.mxu0 0.0
    %255 = vmatprep.subr.mxu0 0.0
    %256 = vmatpush2.msra.mxu0 0.0
    %257 = vmatprep.subr.mxu0 0.0
    %258 = vmatpush2.msra.mxu0 0.0
    %259 = vmatprep.subr.mxu0 0.0
    %260 = vmatpush2.msra.mxu0 0.0
    %261 = vmatprep.subr.mxu0 0.0
    %262 = vmatpush2.msra.mxu0 0.0
    %263 = vmatprep.subr.mxu0 0.0
    %264 = vmatpush2.msra.mxu0 0.0
    %265 = vmatprep.subr.mxu0 0.0
    %266 = vmatpush2.msra.mxu0 0.0
    %267 = vmatprep.subr.mxu0 0.0
    %268 = vmatpush2.msra.mxu0 0.0
    %269 = vmatprep.subr.mxu0 0.0
    %270 = vmatpush2.msra.mxu0 0.0
    %271 = vmatprep.subr.mxu0 0.0
    %272 = vmatpush2.msra.mxu0 0.0
    %273 = vmatprep.subr.mxu0 0.0
    %274 = vmatpush2.msra.mxu0 0.0
    %275 = vmatprep.subr.mxu0 0.0
    %276 = vmatpush2.msra.mxu0 0.0
    %277 = vmatprep.subr.mxu0 0.0
    %278 = vmatpush2.msra.mxu0 0.0
    %279 = vmatprep.subr.mxu0 0.0
    %280 = vmatpush2.msra.mxu0 0.0
    %281 = vmatprep.subr.mxu0 0.0
    %282 = vmatpush2.msra.mxu0 0.0
    %283 = vmatprep.mubr.f32.mxu0 0.0
    %284 = vmatmul.mubr.f32.gmra.mxu0 %v217
    %v285 = vpop.f32.mrf.mxu0
    %v286 = vadd.f32 0.0, %v285
    %v287 = vpop.f32.mrf.mxu0
    %288 = vdwg.mxu0
    %289 = vst [vmem:[#allocation7 + $0x4] sm:$0x3] %v286
    %290 = vset.pattern.permute.xlu0 3
    %291 = vperm.xlu0 %290, %v38
    %v292 = vpop.permute.xlu0 %291
    %vm293 = vcmp.eq.s32.totalorder %v48, %v292
    %v294 = vsel %vm293, 1, 0
    %v295 = vcvt.s32.f32 %v294
    %v297 = vsel %vm55, %v295, 0
    %299 = vmatprep.subr.mxu0 0.0
    %300 = vmatpush1.msra.mxu0 0.0
    %301 = vmatprep.subr.mxu0 0.0
    %302 = vmatpush1.msra.mxu0 0.0
    %303 = vmatprep.subr.mxu0 0.0
    %304 = vmatpush1.msra.mxu0 0.0
    %305 = vmatprep.subr.mxu0 0.0
    %306 = vmatpush1.msra.mxu0 0.0
    %307 = vmatprep.subr.mxu0 0.0
    %308 = vmatpush1.msra.mxu0 0.0
    %309 = vmatprep.subr.mxu0 0.0
    %310 = vmatpush1.msra.mxu0 0.0
    %311 = vmatprep.subr.mxu0 0.0
    %312 = vmatpush1.msra.mxu0 0.0
    %313 = vmatprep.subr.mxu0 0.0
    %314 = vmatpush1.msra.mxu0 0.0
    %315 = vmatprep.subr.mxu0 0.0
    %316 = vmatpush1.msra.mxu0 %v46
    %317 = vmatprep.subr.mxu0 0.0
    %318 = vmatpush1.msra.mxu0 %v45
    %319 = vmatprep.subr.mxu0 0.0
    %320 = vmatpush1.msra.mxu0 %v44
    %321 = vmatprep.subr.mxu0 0.0
    %322 = vmatpush1.msra.mxu0 %v43
    %323 = vmatprep.subr.mxu0 0.0
    %324 = vmatpush1.msra.mxu0 %v42
    %325 = vmatprep.subr.mxu0 0.0
    %326 = vmatpush1.msra.mxu0 %v41
    %327 = vmatprep.subr.mxu0 0.0
    %328 = vmatpush1.msra.mxu0 %v40
    %329 = vmatprep.subr.mxu0 0.0
    %330 = vmatpush1.msra.mxu0 %v39
    %331 = vmatprep.subr.mxu0 0.0
    %332 = vmatpush2.msra.mxu0 0.0
    %333 = vmatprep.subr.mxu0 0.0
    %334 = vmatpush2.msra.mxu0 0.0
    %335 = vmatprep.subr.mxu0 0.0
    %336 = vmatpush2.msra.mxu0 0.0
    %337 = vmatprep.subr.mxu0 0.0
    %338 = vmatpush2.msra.mxu0 0.0
    %339 = vmatprep.subr.mxu0 0.0
    %340 = vmatpush2.msra.mxu0 0.0
    %341 = vmatprep.subr.mxu0 0.0
    %342 = vmatpush2.msra.mxu0 0.0
    %343 = vmatprep.subr.mxu0 0.0
    %344 = vmatpush2.msra.mxu0 0.0
    %345 = vmatprep.subr.mxu0 0.0
    %346 = vmatpush2.msra.mxu0 0.0
    %347 = vmatprep.subr.mxu0 0.0
    %348 = vmatpush2.msra.mxu0 0.0
    %349 = vmatprep.subr.mxu0 0.0
    %350 = vmatpush2.msra.mxu0 0.0
    %351 = vmatprep.subr.mxu0 0.0
    %352 = vmatpush2.msra.mxu0 0.0
    %353 = vmatprep.subr.mxu0 0.0
    %354 = vmatpush2.msra.mxu0 0.0
    %355 = vmatprep.subr.mxu0 0.0
    %356 = vmatpush2.msra.mxu0 0.0
    %357 = vmatprep.subr.mxu0 0.0
    %358 = vmatpush2.msra.mxu0 0.0
    %359 = vmatprep.subr.mxu0 0.0
    %360 = vmatpush2.msra.mxu0 0.0
    %361 = vmatprep.subr.mxu0 0.0
    %362 = vmatpush2.msra.mxu0 0.0
    %363 = vmatprep.mubr.f32.mxu0 0.0
    %364 = vmatmul.mubr.f32.gmra.mxu0 %v297
    %v365 = vpop.f32.mrf.mxu0
    %v366 = vadd.f32 0.0, %v365
    %v367 = vpop.f32.mrf.mxu0
    %368 = vdwg.mxu0
    %369 = vst [vmem:[#allocation7 + $0x6] sm:$0x3] %v366
    %370 = vset.pattern.permute.xlu0 4
    %371 = vperm.xlu0 %370, %v38
    %v372 = vpop.permute.xlu0 %371
    %vm373 = vcmp.eq.s32.totalorder %v48, %v372
    %v374 = vsel %vm373, 1, 0
    %v375 = vcvt.s32.f32 %v374
    %v377 = vsel %vm55, %v375, 0
    %379 = vmatprep.subr.mxu0 0.0
    %380 = vmatpush1.msra.mxu0 0.0
    %381 = vmatprep.subr.mxu0 0.0
    %382 = vmatpush1.msra.mxu0 0.0
    %383 = vmatprep.subr.mxu0 0.0
    %384 = vmatpush1.msra.mxu0 0.0
    %385 = vmatprep.subr.mxu0 0.0
    %386 = vmatpush1.msra.mxu0 0.0
    %387 = vmatprep.subr.mxu0 0.0
    %388 = vmatpush1.msra.mxu0 0.0
    %389 = vmatprep.subr.mxu0 0.0
    %390 = vmatpush1.msra.mxu0 0.0
    %391 = vmatprep.subr.mxu0 0.0
    %392 = vmatpush1.msra.mxu0 0.0
    %393 = vmatprep.subr.mxu0 0.0
    %394 = vmatpush1.msra.mxu0 0.0
    %395 = vmatprep.subr.mxu0 0.0
    %396 = vmatpush1.msra.mxu0 %v46
    %397 = vmatprep.subr.mxu0 0.0
    %398 = vmatpush1.msra.mxu0 %v45
    %399 = vmatprep.subr.mxu0 0.0
    %400 = vmatpush1.msra.mxu0 %v44
    %401 = vmatprep.subr.mxu0 0.0
    %402 = vmatpush1.msra.mxu0 %v43
    %403 = vmatprep.subr.mxu0 0.0
    %404 = vmatpush1.msra.mxu0 %v42
    %405 = vmatprep.subr.mxu0 0.0
    %406 = vmatpush1.msra.mxu0 %v41
    %407 = vmatprep.subr.mxu0 0.0
    %408 = vmatpush1.msra.mxu0 %v40
    %409 = vmatprep.subr.mxu0 0.0
    %410 = vmatpush1.msra.mxu0 %v39
    %411 = vmatprep.subr.mxu0 0.0
    %412 = vmatpush2.msra.mxu0 0.0
    %413 = vmatprep.subr.mxu0 0.0
    %414 = vmatpush2.msra.mxu0 0.0
    %415 = vmatprep.subr.mxu0 0.0
    %416 = vmatpush2.msra.mxu0 0.0
    %417 = vmatprep.subr.mxu0 0.0
    %418 = vmatpush2.msra.mxu0 0.0
    %419 = vmatprep.subr.mxu0 0.0
    %420 = vmatpush2.msra.mxu0 0.0
    %421 = vmatprep.subr.mxu0 0.0
    %422 = vmatpush2.msra.mxu0 0.0
    %423 = vmatprep.subr.mxu0 0.0
    %424 = vmatpush2.msra.mxu0 0.0
    %425 = vmatprep.subr.mxu0 0.0
    %426 = vmatpush2.msra.mxu0 0.0
    %427 = vmatprep.subr.mxu0 0.0
    %428 = vmatpush2.msra.mxu0 0.0
    %429 = vmatprep.subr.mxu0 0.0
    %430 = vmatpush2.msra.mxu0 0.0
    %431 = vmatprep.subr.mxu0 0.0
    %432 = vmatpush2.msra.mxu0 0.0
    %433 = vmatprep.subr.mxu0 0.0
    %434 = vmatpush2.msra.mxu0 0.0
    %435 = vmatprep.subr.mxu0 0.0
    %436 = vmatpush2.msra.mxu0 0.0
    %437 = vmatprep.subr.mxu0 0.0
    %438 = vmatpush2.msra.mxu0 0.0
    %439 = vmatprep.subr.mxu0 0.0
    %440 = vmatpush2.msra.mxu0 0.0
    %441 = vmatprep.subr.mxu0 0.0
    %442 = vmatpush2.msra.mxu0 0.0
    %443 = vmatprep.mubr.f32.mxu0 0.0
    %444 = vmatmul.mubr.f32.gmra.mxu0 %v377
    %v445 = vpop.f32.mrf.mxu0
    %v446 = vadd.f32 0.0, %v445
    %v447 = vpop.f32.mrf.mxu0
    %448 = vdwg.mxu0
    %449 = vst [vmem:[#allocation7 + $0x8] sm:$0x3] %v446
    %450 = vset.pattern.permute.xlu0 5
    %451 = vperm.xlu0 %450, %v38
    %v452 = vpop.permute.xlu0 %451
    %vm453 = vcmp.eq.s32.totalorder %v48, %v452
    %v454 = vsel %vm453, 1, 0
    %v455 = vcvt.s32.f32 %v454
    %v457 = vsel %vm55, %v455, 0
    %459 = vmatprep.subr.mxu0 0.0
    %460 = vmatpush1.msra.mxu0 0.0
    %461 = vmatprep.subr.mxu0 0.0
    %462 = vmatpush1.msra.mxu0 0.0
    %463 = vmatprep.subr.mxu0 0.0
    %464 = vmatpush1.msra.mxu0 0.0
    %465 = vmatprep.subr.mxu0 0.0
    %466 = vmatpush1.msra.mxu0 0.0
    %467 = vmatprep.subr.mxu0 0.0
    %468 = vmatpush1.msra.mxu0 0.0
    %469 = vmatprep.subr.mxu0 0.0
    %470 = vmatpush1.msra.mxu0 0.0
    %471 = vmatprep.subr.mxu0 0.0
    %472 = vmatpush1.msra.mxu0 0.0
    %473 = vmatprep.subr.mxu0 0.0
    %474 = vmatpush1.msra.mxu0 0.0
    %475 = vmatprep.subr.mxu0 0.0
    %476 = vmatpush1.msra.mxu0 %v46
    %477 = vmatprep.subr.mxu0 0.0
    %478 = vmatpush1.msra.mxu0 %v45
    %479 = vmatprep.subr.mxu0 0.0
    %480 = vmatpush1.msra.mxu0 %v44
    %481 = vmatprep.subr.mxu0 0.0
    %482 = vmatpush1.msra.mxu0 %v43
    %483 = vmatprep.subr.mxu0 0.0
    %484 = vmatpush1.msra.mxu0 %v42
    %485 = vmatprep.subr.mxu0 0.0
    %486 = vmatpush1.msra.mxu0 %v41
    %487 = vmatprep.subr.mxu0 0.0
    %488 = vmatpush1.msra.mxu0 %v40
    %489 = vmatprep.subr.mxu0 0.0
    %490 = vmatpush1.msra.mxu0 %v39
    %491 = vmatprep.subr.mxu0 0.0
    %492 = vmatpush2.msra.mxu0 0.0
    %493 = vmatprep.subr.mxu0 0.0
    %494 = vmatpush2.msra.mxu0 0.0
    %495 = vmatprep.subr.mxu0 0.0
    %496 = vmatpush2.msra.mxu0 0.0
    %497 = vmatprep.subr.mxu0 0.0
    %498 = vmatpush2.msra.mxu0 0.0
    %499 = vmatprep.subr.mxu0 0.0
    %500 = vmatpush2.msra.mxu0 0.0
    %501 = vmatprep.subr.mxu0 0.0
    %502 = vmatpush2.msra.mxu0 0.0
    %503 = vmatprep.subr.mxu0 0.0
    %504 = vmatpush2.msra.mxu0 0.0
    %505 = vmatprep.subr.mxu0 0.0
    %506 = vmatpush2.msra.mxu0 0.0
    %507 = vmatprep.subr.mxu0 0.0
    %508 = vmatpush2.msra.mxu0 0.0
    %509 = vmatprep.subr.mxu0 0.0
    %510 = vmatpush2.msra.mxu0 0.0
    %511 = vmatprep.subr.mxu0 0.0
    %512 = vmatpush2.msra.mxu0 0.0
    %513 = vmatprep.subr.mxu0 0.0
    %514 = vmatpush2.msra.mxu0 0.0
    %515 = vmatprep.subr.mxu0 0.0
    %516 = vmatpush2.msra.mxu0 0.0
    %517 = vmatprep.subr.mxu0 0.0
    %518 = vmatpush2.msra.mxu0 0.0
    %519 = vmatprep.subr.mxu0 0.0
    %520 = vmatpush2.msra.mxu0 0.0
    %521 = vmatprep.subr.mxu0 0.0
    %522 = vmatpush2.msra.mxu0 0.0
    %523 = vmatprep.mubr.f32.mxu0 0.0
    %524 = vmatmul.mubr.f32.gmra.mxu0 %v457
    %v525 = vpop.f32.mrf.mxu0
    %v526 = vadd.f32 0.0, %v525
    %v527 = vpop.f32.mrf.mxu0
    %528 = vdwg.mxu0
    %529 = vst [vmem:[#allocation7 + $0xa] sm:$0x3] %v526
    %530 = vset.pattern.permute.xlu0 6
    %531 = vperm.xlu0 %530, %v38
    %v532 = vpop.permute.xlu0 %531
    %vm533 = vcmp.eq.s32.totalorder %v48, %v532
    %v534 = vsel %vm533, 1, 0
    %v535 = vcvt.s32.f32 %v534
    %v537 = vsel %vm55, %v535, 0
    %539 = vmatprep.subr.mxu0 0.0
    %540 = vmatpush1.msra.mxu0 0.0
    %541 = vmatprep.subr.mxu0 0.0
    %542 = vmatpush1.msra.mxu0 0.0
    %543 = vmatprep.subr.mxu0 0.0
    %544 = vmatpush1.msra.mxu0 0.0
    %545 = vmatprep.subr.mxu0 0.0
    %546 = vmatpush1.msra.mxu0 0.0
    %547 = vmatprep.subr.mxu0 0.0
    %548 = vmatpush1.msra.mxu0 0.0
    %549 = vmatprep.subr.mxu0 0.0
    %550 = vmatpush1.msra.mxu0 0.0
    %551 = vmatprep.subr.mxu0 0.0
    %552 = vmatpush1.msra.mxu0 0.0
    %553 = vmatprep.subr.mxu0 0.0
    %554 = vmatpush1.msra.mxu0 0.0
    %555 = vmatprep.subr.mxu0 0.0
    %556 = vmatpush1.msra.mxu0 %v46
    %557 = vmatprep.subr.mxu0 0.0
    %558 = vmatpush1.msra.mxu0 %v45
    %559 = vmatprep.subr.mxu0 0.0
    %560 = vmatpush1.msra.mxu0 %v44
    %561 = vmatprep.subr.mxu0 0.0
    %562 = vmatpush1.msra.mxu0 %v43
    %563 = vmatprep.subr.mxu0 0.0
    %564 = vmatpush1.msra.mxu0 %v42
    %565 = vmatprep.subr.mxu0 0.0
    %566 = vmatpush1.msra.mxu0 %v41
    %567 = vmatprep.subr.mxu0 0.0
    %568 = vmatpush1.msra.mxu0 %v40
    %569 = vmatprep.subr.mxu0 0.0
    %570 = vmatpush1.msra.mxu0 %v39
    %571 = vmatprep.subr.mxu0 0.0
    %572 = vmatpush2.msra.mxu0 0.0
    %573 = vmatprep.subr.mxu0 0.0
    %574 = vmatpush2.msra.mxu0 0.0
    %575 = vmatprep.subr.mxu0 0.0
    %576 = vmatpush2.msra.mxu0 0.0
    %577 = vmatprep.subr.mxu0 0.0
    %578 = vmatpush2.msra.mxu0 0.0
    %579 = vmatprep.subr.mxu0 0.0
    %580 = vmatpush2.msra.mxu0 0.0
    %581 = vmatprep.subr.mxu0 0.0
    %582 = vmatpush2.msra.mxu0 0.0
    %583 = vmatprep.subr.mxu0 0.0
    %584 = vmatpush2.msra.mxu0 0.0
    %585 = vmatprep.subr.mxu0 0.0
    %586 = vmatpush2.msra.mxu0 0.0
    %587 = vmatprep.subr.mxu0 0.0
    %588 = vmatpush2.msra.mxu0 0.0
    %589 = vmatprep.subr.mxu0 0.0
    %590 = vmatpush2.msra.mxu0 0.0
    %591 = vmatprep.subr.mxu0 0.0
    %592 = vmatpush2.msra.mxu0 0.0
    %593 = vmatprep.subr.mxu0 0.0
    %594 = vmatpush2.msra.mxu0 0.0
    %595 = vmatprep.subr.mxu0 0.0
    %596 = vmatpush2.msra.mxu0 0.0
    %597 = vmatprep.subr.mxu0 0.0
    %598 = vmatpush2.msra.mxu0 0.0
    %599 = vmatprep.subr.mxu0 0.0
    %600 = vmatpush2.msra.mxu0 0.0
    %601 = vmatprep.subr.mxu0 0.0
    %602 = vmatpush2.msra.mxu0 0.0
    %603 = vmatprep.mubr.f32.mxu0 0.0
    %604 = vmatmul.mubr.f32.gmra.mxu0 %v537
    %v605 = vpop.f32.mrf.mxu0
    %v606 = vadd.f32 0.0, %v605
    %v607 = vpop.f32.mrf.mxu0
    %608 = vdwg.mxu0
    %609 = vst [vmem:[#allocation7 + $0xc] sm:$0x3] %v606
    %610 = vset.pattern.permute.xlu0 7
    %611 = vperm.xlu0 %610, %v38
    %v612 = vpop.permute.xlu0 %611
    %vm613 = vcmp.eq.s32.totalorder %v48, %v612
    %v614 = vsel %vm613, 1, 0
    %v615 = vcvt.s32.f32 %v614
    %v617 = vsel %vm55, %v615, 0
    %619 = vmatprep.subr.mxu0 0.0
    %620 = vmatpush1.msra.mxu0 0.0
    %621 = vmatprep.subr.mxu0 0.0
    %622 = vmatpush1.msra.mxu0 0.0
    %623 = vmatprep.subr.mxu0 0.0
    %624 = vmatpush1.msra.mxu0 0.0
    %625 = vmatprep.subr.mxu0 0.0
    %626 = vmatpush1.msra.mxu0 0.0
    %627 = vmatprep.subr.mxu0 0.0
    %628 = vmatpush1.msra.mxu0 0.0
    %629 = vmatprep.subr.mxu0 0.0
    %630 = vmatpush1.msra.mxu0 0.0
    %631 = vmatprep.subr.mxu0 0.0
    %632 = vmatpush1.msra.mxu0 0.0
    %633 = vmatprep.subr.mxu0 0.0
    %634 = vmatpush1.msra.mxu0 0.0
    %635 = vmatprep.subr.mxu0 0.0
    %636 = vmatpush1.msra.mxu0 %v46
    %637 = vmatprep.subr.mxu0 0.0
    %638 = vmatpush1.msra.mxu0 %v45
    %639 = vmatprep.subr.mxu0 0.0
    %640 = vmatpush1.msra.mxu0 %v44
    %641 = vmatprep.subr.mxu0 0.0
    %642 = vmatpush1.msra.mxu0 %v43
    %643 = vmatprep.subr.mxu0 0.0
    %644 = vmatpush1.msra.mxu0 %v42
    %645 = vmatprep.subr.mxu0 0.0
    %646 = vmatpush1.msra.mxu0 %v41
    %647 = vmatprep.subr.mxu0 0.0
    %648 = vmatpush1.msra.mxu0 %v40
    %649 = vmatprep.subr.mxu0 0.0
    %650 = vmatpush1.msra.mxu0 %v39
    %651 = vmatprep.subr.mxu0 0.0
    %652 = vmatpush2.msra.mxu0 0.0
    %653 = vmatprep.subr.mxu0 0.0
    %654 = vmatpush2.msra.mxu0 0.0
    %655 = vmatprep.subr.mxu0 0.0
    %656 = vmatpush2.msra.mxu0 0.0
    %657 = vmatprep.subr.mxu0 0.0
    %658 = vmatpush2.msra.mxu0 0.0
    %659 = vmatprep.subr.mxu0 0.0
    %660 = vmatpush2.msra.mxu0 0.0
    %661 = vmatprep.subr.mxu0 0.0
    %662 = vmatpush2.msra.mxu0 0.0
    %663 = vmatprep.subr.mxu0 0.0
    %664 = vmatpush2.msra.mxu0 0.0
    %665 = vmatprep.subr.mxu0 0.0
    %666 = vmatpush2.msra.mxu0 0.0
    %667 = vmatprep.subr.mxu0 0.0
    %668 = vmatpush2.msra.mxu0 0.0
    %669 = vmatprep.subr.mxu0 0.0
    %670 = vmatpush2.msra.mxu0 0.0
    %671 = vmatprep.subr.mxu0 0.0
    %672 = vmatpush2.msra.mxu0 0.0
    %673 = vmatprep.subr.mxu0 0.0
    %674 = vmatpush2.msra.mxu0 0.0
    %675 = vmatprep.subr.mxu0 0.0
    %676 = vmatpush2.msra.mxu0 0.0
    %677 = vmatprep.subr.mxu0 0.0
    %678 = vmatpush2.msra.mxu0 0.0
    %679 = vmatprep.subr.mxu0 0.0
    %680 = vmatpush2.msra.mxu0 0.0
    %681 = vmatprep.subr.mxu0 0.0
    %682 = vmatpush2.msra.mxu0 0.0
    %683 = vmatprep.mubr.f32.mxu0 0.0
    %684 = vmatmul.mubr.f32.gmra.mxu0 %v617
    %v685 = vpop.f32.mrf.mxu0
    %v686 = vadd.f32 0.0, %v685
    %v687 = vpop.f32.mrf.mxu0
    %688 = vdwg.mxu0
    %689 = vst [vmem:[#allocation7 + $0xe] sm:$0x3] %v686
    // Predicated region
    $region18: #{tpu_custom_call.1} parent=1 // pred_check
      _
    $region19: #{tpu_custom_call.1} parent=1 // pred_check_branch
      %691 = sbr.rel (0) target = $region21
    $region20: #{tpu_custom_call.1} parent=1 // pred_region
      %s693 = ssub.s32 256, 256
      %694 = vsyncadd [#allocation4], %s693
      %s695 = sshll.u32 [#allocation7], 4
      %s696 = int_to_ptr.vmem [resolvable:$true] %s695
      %701 = dma.vmem_to_hbm [thread:$0]  %s696, 256, %s2, [#allocation4], 128, 128, 8
    $region21: #{tpu_custom_call.1} parent=1 // pred_fallthru
      _
    // Predicated region
    $region22: #{tpu_custom_call.1} parent=1 // pred_check
      _
    $region23: #{tpu_custom_call.1} parent=1 // pred_check_branch
      %703 = sbr.rel (0) target = $region25
    $region24: #{tpu_custom_call.1} parent=1 // pred_region
      %704 = dma.done [#allocation4], 256
    $region25: #{tpu_custom_call.1} parent=1 // pred_fallthru
      _
    %705 = vsyncpa [#allocation3], 1
    %706 = vsyncpa [#allocation6], 1
    %707 = vsyncpa [#allocation4], 1

</llo_original>
